<compile_context>
chip_gen: v7x
topology: tpu7x:2x2x1
jax: 0.10.0
libtpu: 0.0.40
codegen_flags: <defaults>
</compile_context>

<pallas_src>
import functools

import jax
import jax.numpy as jnp
from jax.experimental import pallas as pl
from jax.experimental.pallas import tpu as pltpu


# ---------------------------------------------------------------------------
# Fast path: no data movement at all.
# ---------------------------------------------------------------------------
def _noop_kernel(x_ref, o_ref):
    del x_ref
    # Fake read+write dep so Mosaic records a def of the (aliased) output;
    # no DMA, no vreg traffic.
    pltpu.touch(o_ref)


def _noop_identity(x):
    return pl.pallas_call(
        _noop_kernel,
        out_shape=jax.ShapeDtypeStruct(x.shape, x.dtype),
        in_specs=[pl.BlockSpec(memory_space=pl.ANY)],
        out_specs=pl.BlockSpec(memory_space=pl.ANY),
        # Output *is* the input buffer; donate x at the jit boundary to make
        # this a literal zero-copy (otherwise XLA adds one defensive copy).
        input_output_aliases={0: 0},
        cost_estimate=pl.CostEstimate(flops=0, transcendentals=0, bytes_accessed=0),
    )(x)


@functools.cache
def _noop_supported():
    """One-time probe: does the ANY-space / touch no-op lower on this stack?"""
    try:
        probe = jnp.zeros((8, 128), jnp.float32)
        jax.block_until_ready(_noop_identity(probe))
        return True
    except Exception:  # pragma: no cover - only on older jax/libtpu stacks
        return False


# ---------------------------------------------------------------------------
# Fallback path: HBM-roofline tiled copy.
# ---------------------------------------------------------------------------
def _copy_kernel(x_ref, o_ref):
    o_ref[...] = x_ref[...]


def _sublane_multiple(dtype):
    itemsize = jnp.dtype(dtype).itemsize
    return {4: 8, 2: 16, 1: 32}.get(itemsize, 8)


def _copy_identity(x):
    orig_shape = x.shape
    n = x.size
    itemsize = jnp.dtype(x.dtype).itemsize
    sub = _sublane_multiple(x.dtype)

    # Lane-dense 2-D view: a contiguous reshape is a free view at the XLA
    # level (unlike pad/slice).  Prefer a wide multiple-of-128 lane dim so
    # stores are unmasked, full-width vst; otherwise keep the true minor dim.
    lanes = None
    for cand in (1024, 512, 256, 128):
        if n % cand == 0:
            lanes = cand
            break
    if lanes is None:
        lanes = x.shape[-1] if x.ndim >= 2 else max(n, 1)
    x2d = x.reshape(-1, lanes)
    rows, cols = x2d.shape

    # ~4 MiB tiles: amortizes the ~0.35 us per-grid-step overhead on all of
    # v5e / v6e / v7x while keeping the double-buffered in+out footprint
    # (4 * tile = 16 MiB) well under v7x's 64 MiB physical VMEM.
    target_tile_bytes = 4 * 1024 * 1024

    # Column (lane) tiling so a single block never exceeds VMEM for very wide
    # rows or large 1-D inputs reshaped to (1, N).
    row_quota = max(1, min(rows, sub))
    max_cols_per_block = max(128, (target_tile_bytes // (row_quota * itemsize)) // 128 * 128)
    block_cols = cols if cols <= max_cols_per_block else max_cols_per_block

    bytes_per_block_row = max(block_cols * itemsize, 1)
    if rows <= sub or rows * bytes_per_block_row <= target_tile_bytes:
        block_rows = rows  # full extent -> always a legal block shape
    else:
        # Dtype-native sublane rounding; no forced multi-step split (grid axes
        # are a serial loop on single-TensorCore chips).
        block_rows = max(sub, (target_tile_bytes // bytes_per_block_row) // sub * sub)

    grid = (pl.cdiv(rows, block_rows), pl.cdiv(cols, block_cols))

    out2d = pl.pallas_call(
        _copy_kernel,
        out_shape=jax.ShapeDtypeStruct((rows, cols), x2d.dtype),
        grid_spec=pltpu.PrefetchScalarGridSpec(
            num_scalar_prefetch=0,
            grid=grid,
            in_specs=[pl.BlockSpec((block_rows, block_cols), lambda i, j: (i, j))],
            out_specs=pl.BlockSpec((block_rows, block_cols), lambda i, j: (i, j)),
        ),
        input_output_aliases={0: 0},
        cost_estimate=pl.CostEstimate(
            flops=0, transcendentals=0, bytes_accessed=2 * n * itemsize
        ),
        compiler_params=pltpu.CompilerParams(
            dimension_semantics=("parallel", "parallel"),
            vmem_limit_bytes=32 * 1024 * 1024,
        ),
    )(x2d)

    return out2d.reshape(orig_shape)


# ---------------------------------------------------------------------------
# Public forward.
# ---------------------------------------------------------------------------
def id_forward(x, **kwargs):
    """Forward pass of ID: returns x unchanged (routed through a Pallas kernel)."""
    x = jnp.asarray(x)
    if x.size == 0:
        # Degenerate empty array: nothing to launch a kernel for.
        return x
    if _noop_supported():
        return _noop_identity(x)
    return _copy_identity(x)


if __name__ == "__main__":
    key = jax.random.PRNGKey(0)
    # Small NCHW-style input consistent with an audio-model forward.
    x = jax.random.normal(key, (2, 4, 16, 16), dtype=jnp.float32)

    y = id_forward(x)
    jax.block_until_ready(y)

    assert y.shape == x.shape and y.dtype == x.dtype
    assert bool(jnp.all(y == x))
    print("KERNEL_OK")
</pallas_src>

<mosaic_0001>
module attributes {stable_mosaic.version = 11 : i64} {
  func.func @_noop_kernel(%arg0: memref<8x128xf32, #tpu.memory_space<any>>, %arg1: memref<8x128xf32, #tpu.memory_space<any>>) attributes {dimension_semantics = [], scalar_prefetch = 0 : i64, scratch_operands = 0 : i64, tpu.core_type = #tpu.core_type<tc>} {
    return
  }
}

module attributes {stable_mosaic.version = 11 : i64} {
  func.func @_copy_kernel(%arg0: i32, %arg1: i32, %arg2: memref<2x1024xf32, #tpu.memory_space<vmem>>, %arg3: memref<2x1024xf32, #tpu.memory_space<vmem>>) attributes {dimension_semantics = [#tpu.dimension_semantics<parallel>, #tpu.dimension_semantics<parallel>], iteration_bounds = array<i64: 1, 1>, scalar_prefetch = 0 : i64, scratch_operands = 0 : i64, tpu.core_type = #tpu.core_type<tc>, window_params = [{transform_indices = @transform_0, window_bounds = array<i64: 2, 1024>}, {transform_indices = @transform_1, window_bounds = array<i64: 2, 1024>}]} {
    %c0 = arith.constant 0 : index
    %c0_0 = arith.constant 0 : index
    %0 = vector.load %arg2[%c0, %c0_0] : memref<2x1024xf32, #tpu.memory_space<vmem>>, vector<2x1024xf32>
    %c0_1 = arith.constant 0 : index
    %c0_2 = arith.constant 0 : index
    %1 = vector.load %arg3[%c0_1, %c0_2] : memref<2x1024xf32, #tpu.memory_space<vmem>>, vector<2x1024xf32>
    tpu.vector_store %arg3[%c0_1, %c0_2], %0 {strides = array<i32>} : memref<2x1024xf32, #tpu.memory_space<vmem>>, vector<2x1024xf32>,
    return
  }
  func.func @transform_0(%arg0: i32, %arg1: i32) -> (i32, i32) {
    %c0_i32 = arith.constant 0 : i32
    return %arg0, %arg1 : i32, i32
  }
  func.func @transform_1(%arg0: i32, %arg1: i32) -> (i32, i32) {
    %c0_i32 = arith.constant 0 : i32
    return %arg0, %arg1 : i32, i32
  }
}

</mosaic_0001>

<llo_original>
// kernel: tpu_custom_call.1
$region0: #{tpu_custom_call.1}
  #allocation0 [shape = 'u32[]', space=smem, size = 0x4, offset = 0x4, fixed_abs, tag = 'smem constant byte address 0x4 - core index']
  #allocation1 [shape = 'u32[144,128]{1,0:T(1,128)}', space=vmem, size = 0x12000, scoped, tag = 'internal scratch']
  %s0 = inlined_call_operand.hbm [shape: f32[8,128], index: 0, kind: input, shape index: {}, may-alias: {0,1}]
  %s1 = inlined_call_operand.hbm [shape: f32[8,128], index: 1, kind: output, shape index: {}, may-alias: {0,1}]
  %s2 = sld [smem:[#allocation0]]
  $region2: #{tpu_custom_call.1} parent=0
    _
  %s4 = ssub.s32 1, %s2
  %s5 = scalar_select 0, %s4, %s2

// kernel: tpu_custom_call.1
$region0: #{tpu_custom_call.1}
  #allocation0 [shape = 'u32[]', space=smem, size = 0x4, offset = 0x4, fixed_abs, tag = 'smem constant byte address 0x4 - core index']
  #allocation1 [shape = 'u32[144,128]{1,0:T(1,128)}', space=vmem, size = 0x12000, scoped, tag = 'internal scratch']
  %s0 = inlined_call_operand.hbm [shape: f32[2,1024], index: 0, kind: input, shape index: {}, may-alias: {0,1}]
  %s1 = inlined_call_operand.hbm [shape: f32[2,1024], index: 1, kind: output, shape index: {}, may-alias: {0,1}]
  %s2 = sld [smem:[#allocation0]]
  $region18: #{tpu_custom_call.1} parent=0
    _
  %s4 = ssub.s32 1, %s2
  %s5 = scalar_select 0, %s4, %s2
  $region1: #{tpu_custom_call.1} parent=0
    #allocation2 [shape = 'u8[8192]{0}', space=vmem, size = 0x2000, scoped, tag = 'input window, operand 0, single buffered']
    #allocation3 [shape = 's32[1]{0}', space=sflag, size = 0x4, scoped, tag = 'scoped memory for tpu_custom_call.1']
    #allocation4 [shape = 's32[1]{0}', space=sflag, size = 0x4, scoped, tag = 'scoped memory for tpu_custom_call.1']
    #allocation5 [shape = 'u8[8192]{0}', space=vmem, size = 0x2000, scoped, tag = 'output window, operand 0, single buffered']
    %6 = vsyncpa [#allocation3], 0
    %7 = vsyncpa [#allocation4], 0
    // Predicated region
    $region2: #{tpu_custom_call.1} parent=1 // pred_check
      _
    $region3: #{tpu_custom_call.1} parent=1 // pred_check_branch
      %9 = sbr.rel (0) target = $region5
    $region4: #{tpu_custom_call.1} parent=1 // pred_region
      %s11 = ssub.s32 256, 256
      %12 = vsyncadd [#allocation3], %s11
      %s14 = sshll.u32 [#allocation2], 4
      %s15 = int_to_ptr.vmem [resolvable:$true] %s14
      %17 = dma.hbm_to_vmem [thread:$0]  %s0, 256, %s15, [#allocation3]
    $region5: #{tpu_custom_call.1} parent=1 // pred_fallthru
      _
    // Predicated region
    $region6: #{tpu_custom_call.1} parent=1 // pred_check
      _
    $region7: #{tpu_custom_call.1} parent=1 // pred_check_branch
      %19 = sbr.rel (0) target = $region9
    $region8: #{tpu_custom_call.1} parent=1 // pred_region
      %20 = dma.done [#allocation3], 256
    $region9: #{tpu_custom_call.1} parent=1 // pred_fallthru
      _
    %v21 = vld [vmem:[#allocation2] sm:$0xff]
    %v22 = vld [vmem:[#allocation2 + $0x8] sm:$0xff]
    %23 = vst [vmem:[#allocation5] sm:$0xff] %v21
    %24 = vst [vmem:[#allocation5 + $0x8] sm:$0xff] %v22
    // Predicated region
    $region10: #{tpu_custom_call.1} parent=1 // pred_check
      _
    $region11: #{tpu_custom_call.1} parent=1 // pred_check_branch
      %26 = sbr.rel (0) target = $region13
    $region12: #{tpu_custom_call.1} parent=1 // pred_region
      %s28 = ssub.s32 256, 256
      %29 = vsyncadd [#allocation4], %s28
      %s31 = sshll.u32 [#allocation5], 4
      %s32 = int_to_ptr.vmem [resolvable:$true] %s31
      %34 = dma.vmem_to_hbm [thread:$0]  %s32, 256, %s1, [#allocation4]
    $region13: #{tpu_custom_call.1} parent=1 // pred_fallthru
      _
    // Predicated region
    $region14: #{tpu_custom_call.1} parent=1 // pred_check
      _
    $region15: #{tpu_custom_call.1} parent=1 // pred_check_branch
      %36 = sbr.rel (0) target = $region17
    $region16: #{tpu_custom_call.1} parent=1 // pred_region
      %37 = dma.done [#allocation4], 256
    $region17: #{tpu_custom_call.1} parent=1 // pred_fallthru
      _
    %38 = vsyncpa [#allocation3], 1
    %39 = vsyncpa [#allocation4], 1

</llo_original>
